<compile_context>
chip_gen: v7x
topology: tpu7x:2x2x1
jax: 0.10.0
libtpu: 0.0.40
codegen_flags: <defaults>
</compile_context>

<pallas_src>
import functools

import numpy as np
import jax
import jax.numpy as jnp
from jax import lax
from jax.experimental import pallas as pl
from jax.experimental.pallas import tpu as pltpu


def _gcq_kernel(slog_ref, pen_ref, u_ref, tri_ref, sizes_ref, *, T, tau,
                randomized, allow_zero_sets):
    """Fused temperature softmax + generalized-inverse-quantile set sizing.

    slog_ref : (TB, C) logits sorted descending along classes.
    pen_ref  : (1, C)  regularization penalties (batch-invariant).
    u_ref    : (TB, 1) uniform randoms for the randomized branch.
    tri_ref  : (C, C)  upper-triangular ones (cumsum-as-matmul operand).
    sizes_ref: (TB, 1) int32 prediction-set sizes.
    """
    TB, C = slog_ref.shape

    # Temperature-scaled softmax of the (already sorted) logits. Rows are
    # sorted descending, so the row max is simply column 0 (no lane reduction).
    x = slog_ref[...].astype(jnp.float32) * (1.0 / T)
    e = jnp.exp(x - x[:, 0:1])
    ordered = e * pl.reciprocal(jnp.sum(e, axis=-1, keepdims=True), approx=True)

    # One MXU matmul computes cumsum(ordered) + cumsum(penalties) fused:
    #   total[b, j] = sum_{i <= j} (ordered[b, i] + pen[0, i])
    total = jnp.dot(ordered + pen_ref[...], tri_ref[...],
                    preferred_element_type=jnp.float32)

    sizes_base = jnp.sum((total <= tau).astype(jnp.int32), axis=-1,
                         keepdims=True) + 1                       # (TB, 1)
    sizes_base = jnp.minimum(sizes_base, C)

    if randomized:
        # Gather ordered/total at column (sizes_base - 1) via one-hot + reduce.
        col = lax.broadcasted_iota(jnp.int32, (TB, C), 1)
        sel = (col == (sizes_base - 1)).astype(jnp.float32)
        ord_at = jnp.sum(ordered * sel, axis=-1, keepdims=True)
        tot_at = jnp.sum(total * sel, axis=-1, keepdims=True)
        # Reference: V = (tau - (cumsum_at - ord_at) - pen_cumsum_at) / ord_at
        #              = (tau - total_at + ord_at) / ord_at
        V = (tau - tot_at + ord_at) * pl.reciprocal(
            jnp.maximum(ord_at, 1e-30), approx=True)   # guard underflowed tails
        sizes = sizes_base - (u_ref[...] >= V).astype(jnp.int32)
    else:
        sizes = sizes_base

    if tau == 1.0:            # static Python branch (tau is a Python float)
        sizes = jnp.full_like(sizes, C)
    if not allow_zero_sets:
        sizes = jnp.where(sizes == 0, 1, sizes)

    # (TB, 1) int32 store is masked (1-wide lane); negligible at these sizes.
    sizes_ref[...] = sizes


def conformal_forward(logits, *, T, penalties, Qhat, u, randomized,
                      allow_zero_sets, block_b=256):
    """Returns (logits, I, sizes); prediction sets are S[i] = I[i, :sizes[i]]."""
    B, C = logits.shape

    # Single descending sort carrying class indices along as values.
    cls = lax.broadcasted_iota(jnp.int32, (B, C), 1)
    neg_sorted, I = lax.sort((-logits.astype(jnp.float32), cls),
                             dimension=1, num_keys=1)
    sorted_logits = -neg_sorted

    # Batch tiling: bounds VMEM, enables double-buffered prefetch, and lets the
    # "parallel" grid axis shard across TensorCores.
    TB = min(block_b, B)
    nb = pl.cdiv(B, TB)
    Bp = nb * TB
    u_p = u
    if Bp != B:
        sorted_logits = jnp.pad(sorted_logits, ((0, Bp - B), (0, 0)))
        u_p = jnp.pad(u, ((0, Bp - B), (0, 0)), constant_values=0.5)

    # Upper-triangular ones, hoisted out of the kernel; constant index_map so it
    # is DMA'd once and reused by every grid step.
    tri = jnp.triu(jnp.ones((C, C), dtype=jnp.float32))

    # Explicit VMEM budget (double-buffered inputs + tri + intermediate slack),
    # clamped for v7x's smaller physical VMEM.
    est = 4 * (2 * (TB * C + TB + C + TB) + 2 * C * C + 8 * TB * C) + (1 << 20)
    vmem_limit = int(min(max(est, 16 << 20), 64 << 20))

    sizes = pl.pallas_call(
        functools.partial(_gcq_kernel, T=float(T), tau=float(Qhat),
                          randomized=randomized,
                          allow_zero_sets=allow_zero_sets),
        out_shape=jax.ShapeDtypeStruct((Bp, 1), jnp.int32),
        grid=(nb,),
        in_specs=[pl.BlockSpec((TB, C), lambda i: (i, 0)),
                  pl.BlockSpec((1, C), lambda i: (0, 0)),
                  pl.BlockSpec((TB, 1), lambda i: (i, 0)),
                  pl.BlockSpec((C, C), lambda i: (0, 0))],
        out_specs=pl.BlockSpec((TB, 1), lambda i: (i, 0)),
        compiler_params=pltpu.CompilerParams(
            dimension_semantics=("parallel",),
            vmem_limit_bytes=vmem_limit),
    )(sorted_logits, penalties.astype(jnp.float32), u_p, tri)

    return logits, I, sizes[:B]


if __name__ == "__main__":
    key = jax.random.PRNGKey(0)
    B, C = 8, 128  # batch, num_classes

    k1, k2 = jax.random.split(key)
    logits = jax.random.normal(k1, (B, C), dtype=jnp.float32) * 3.0
    # Deterministic stand-in for np.random.random() in the randomized branch.
    u = jax.random.uniform(k2, (B, 1), dtype=jnp.float32)

    # Deterministic "calibration" state (what __init__ would produce):
    T = 1.3                      # platt_logits init value
    kreg, lamda = 5, 0.01
    penalties_np = np.zeros((1, C), dtype=np.float32)
    penalties_np[:, kreg:] += lamda
    penalties = jnp.asarray(penalties_np)
    Qhat = 0.93                  # stands in for conformal_calibration_logits output
    # TODO(synk): calibration (platt_logits / conformal_calibration_logits) is
    # data-loader-driven training-time code, not part of forward; parameters
    # are initialized deterministically above instead.

    fwd = jax.jit(functools.partial(
        conformal_forward, T=T, Qhat=Qhat,
        randomized=True, allow_zero_sets=False))
    logits_out, I, sizes = fwd(logits, penalties=penalties, u=u)
    jax.block_until_ready((logits_out, I, sizes))

    # Ragged prediction sets S (same structure gcq returns).
    I_np = np.asarray(I)
    sizes_np = np.asarray(sizes)[:, 0]
    S = [I_np[i, : int(sizes_np[i])] for i in range(B)]
    assert len(S) == B and all(1 <= len(s) <= C for s in S)

    print("KERNEL_OK")
</pallas_src>

<mosaic_0001>
module attributes {stable_mosaic.version = 11 : i64} {
  func.func @_gcq_kernel(%arg0: i32, %arg1: memref<8x128xf32, #tpu.memory_space<vmem>>, %arg2: memref<1x128xf32, #tpu.memory_space<vmem>>, %arg3: memref<8x1xf32, #tpu.memory_space<vmem>>, %arg4: memref<128x128xf32, #tpu.memory_space<vmem>>, %arg5: memref<8x1xi32, #tpu.memory_space<vmem>>) attributes {dimension_semantics = [#tpu.dimension_semantics<parallel>], iteration_bounds = array<i64: 1>, scalar_prefetch = 0 : i64, scratch_operands = 0 : i64, tpu.core_type = #tpu.core_type<tc>, window_params = [{transform_indices = @transform_0, window_bounds = array<i64: 8, 128>}, {pipeline_mode = #tpu.pipeline_mode<synchronous>, transform_indices = @transform_1, window_bounds = array<i64: 1, 128>}, {transform_indices = @transform_2, window_bounds = array<i64: 8, 1>}, {pipeline_mode = #tpu.pipeline_mode<synchronous>, transform_indices = @transform_3, window_bounds = array<i64: 128, 128>}, {transform_indices = @transform_4, window_bounds = array<i64: 8, 1>}]} {
    %c0 = arith.constant 0 : index
    %c0_0 = arith.constant 0 : index
    %0 = vector.load %arg1[%c0, %c0_0] : memref<8x128xf32, #tpu.memory_space<vmem>>, vector<8x128xf32>
    %cst = arith.constant 0.769230782 : f32
    %1 = vector.broadcast %cst : f32 to vector<8x128xf32>
    %2 = arith.mulf %0, %1 : vector<8x128xf32>
    %3 = vector.extract_strided_slice %2 {offsets = [0, 0], sizes = [8, 1], strides = [1, 1]} : vector<8x128xf32> to vector<8x1xf32>
    %4 = vector.broadcast %3 : vector<8x1xf32> to vector<8x128xf32>
    %5 = arith.subf %2, %4 : vector<8x128xf32>
    %6 = math.exp %5 : vector<8x128xf32>
    %cst_1 = arith.constant dense<0.000000e+00> : vector<8xf32>
    %7 = vector.multi_reduction <add>, %6, %cst_1 [1] : vector<8x128xf32> to vector<8xf32>
    %8 = vector.shape_cast %7 : vector<8xf32> to vector<8x1xf32>
    %9 = tpu.reciprocal %8 {approx = true} : vector<8x1xf32> -> vector<8x1xf32>
    %10 = vector.broadcast %9 : vector<8x1xf32> to vector<8x128xf32>
    %11 = arith.mulf %6, %10 : vector<8x128xf32>
    %c0_2 = arith.constant 0 : index
    %c0_3 = arith.constant 0 : index
    %12 = vector.load %arg2[%c0_2, %c0_3] : memref<1x128xf32, #tpu.memory_space<vmem>>, vector<1x128xf32>
    %13 = vector.broadcast %12 : vector<1x128xf32> to vector<8x128xf32>
    %14 = arith.addf %11, %13 : vector<8x128xf32>
    %c0_4 = arith.constant 0 : index
    %c0_5 = arith.constant 0 : index
    %15 = vector.load %arg4[%c0_4, %c0_5] : memref<128x128xf32, #tpu.memory_space<vmem>>, vector<128x128xf32>
    %cst_6 = arith.constant dense<0.000000e+00> : vector<8x128xf32>
    %16 = tpu.matmul %14, %15, %cst_6 {dimension_numbers = #tpu.dot_dimension_numbers<[1], [0], [0], [1], [0, 0, 1, 1], [], []>} : vector<8x128xf32>, vector<128x128xf32>, vector<8x128xf32> -> vector<8x128xf32>
    %cst_7 = arith.constant 9.300000e-01 : f32
    %17 = vector.broadcast %cst_7 : f32 to vector<8x128xf32>
    %18 = arith.cmpf ole, %16, %17 : vector<8x128xf32>
    %19 = arith.extui %18 : vector<8x128xi1> to vector<8x128xi32>
    %cst_8 = arith.constant dense<0> : vector<8xi32>
    %20 = vector.multi_reduction <add>, %19, %cst_8 [1] : vector<8x128xi32> to vector<8xi32>
    %21 = vector.shape_cast %20 : vector<8xi32> to vector<8x1xi32>
    %c1_i32 = arith.constant 1 : i32
    %22 = vector.broadcast %c1_i32 : i32 to vector<8x1xi32>
    %23 = arith.addi %21, %22 : vector<8x1xi32>
    %c128_i32 = arith.constant 128 : i32
    %24 = vector.broadcast %c128_i32 : i32 to vector<8x1xi32>
    %25 = arith.minsi %23, %24 : vector<8x1xi32>
    %26 = tpu.iota {dimensions = array<i32: 1>} : vector<8x128xi32>
    %c1_i32_9 = arith.constant 1 : i32
    %27 = vector.broadcast %c1_i32_9 : i32 to vector<8x1xi32>
    %28 = arith.subi %25, %27 : vector<8x1xi32>
    %29 = vector.broadcast %28 : vector<8x1xi32> to vector<8x128xi32>
    %30 = arith.cmpi eq, %26, %29 : vector<8x128xi32>
    %31 = arith.extui %30 : vector<8x128xi1> to vector<8x128xi32>
    %32 = arith.sitofp %31 : vector<8x128xi32> to vector<8x128xf32>
    %33 = arith.mulf %11, %32 : vector<8x128xf32>
    %cst_10 = arith.constant dense<0.000000e+00> : vector<8xf32>
    %34 = vector.multi_reduction <add>, %33, %cst_10 [1] : vector<8x128xf32> to vector<8xf32>
    %35 = vector.shape_cast %34 : vector<8xf32> to vector<8x1xf32>
    %36 = arith.mulf %16, %32 : vector<8x128xf32>
    %cst_11 = arith.constant dense<0.000000e+00> : vector<8xf32>
    %37 = vector.multi_reduction <add>, %36, %cst_11 [1] : vector<8x128xf32> to vector<8xf32>
    %38 = vector.shape_cast %37 : vector<8xf32> to vector<8x1xf32>
    %cst_12 = arith.constant 9.300000e-01 : f32
    %39 = vector.broadcast %cst_12 : f32 to vector<8x1xf32>
    %40 = arith.subf %39, %38 : vector<8x1xf32>
    %41 = arith.addf %40, %35 : vector<8x1xf32>
    %cst_13 = arith.constant 1.000000e-30 : f32
    %42 = vector.broadcast %cst_13 : f32 to vector<8x1xf32>
    %43 = arith.maximumf %35, %42 : vector<8x1xf32>
    %44 = tpu.reciprocal %43 {approx = true} : vector<8x1xf32> -> vector<8x1xf32>
    %45 = arith.mulf %41, %44 : vector<8x1xf32>
    %c0_14 = arith.constant 0 : index
    %c0_15 = arith.constant 0 : index
    %46 = vector.load %arg3[%c0_14, %c0_15] : memref<8x1xf32, #tpu.memory_space<vmem>>, vector<8x1xf32>
    %47 = arith.cmpf oge, %46, %45 : vector<8x1xf32>
    %48 = arith.extui %47 : vector<8x1xi1> to vector<8x1xi32>
    %49 = arith.subi %25, %48 : vector<8x1xi32>
    %c0_i32 = arith.constant 0 : i32
    %50 = vector.broadcast %c0_i32 : i32 to vector<8x1xi32>
    %51 = arith.cmpi eq, %49, %50 : vector<8x1xi32>
    %c1_i32_16 = arith.constant 1 : i32
    %52 = vector.broadcast %c1_i32_16 : i32 to vector<8x1xi32>
    %53 = arith.select %51, %52, %49 : vector<8x1xi1>, vector<8x1xi32>
    %c0_17 = arith.constant 0 : index
    %c0_18 = arith.constant 0 : index
    %54 = vector.load %arg5[%c0_17, %c0_18] : memref<8x1xi32, #tpu.memory_space<vmem>>, vector<8x1xi32>
    tpu.vector_store %arg5[%c0_17, %c0_18], %53 {strides = array<i32>} : memref<8x1xi32, #tpu.memory_space<vmem>>, vector<8x1xi32>,
    return
  }
  func.func @transform_0(%arg0: i32) -> (i32, i32) {
    %c0_i32 = arith.constant 0 : i32
    %c0_i32_0 = arith.constant 0 : i32
    return %arg0, %c0_i32 : i32, i32
  }
  func.func @transform_1(%arg0: i32) -> (i32, i32) {
    %c0_i32 = arith.constant 0 : i32
    %c0_i32_0 = arith.constant 0 : i32
    %c0_i32_1 = arith.constant 0 : i32
    return %c0_i32, %c0_i32_0 : i32, i32
  }
  func.func @transform_2(%arg0: i32) -> (i32, i32) {
    %c0_i32 = arith.constant 0 : i32
    %c0_i32_0 = arith.constant 0 : i32
    return %arg0, %c0_i32 : i32, i32
  }
  func.func @transform_3(%arg0: i32) -> (i32, i32) {
    %c0_i32 = arith.constant 0 : i32
    %c0_i32_0 = arith.constant 0 : i32
    %c0_i32_1 = arith.constant 0 : i32
    return %c0_i32, %c0_i32_0 : i32, i32
  }
  func.func @transform_4(%arg0: i32) -> (i32, i32) {
    %c0_i32 = arith.constant 0 : i32
    %c0_i32_0 = arith.constant 0 : i32
    return %arg0, %c0_i32 : i32, i32
  }
}

</mosaic_0001>

<llo_original>
// kernel: neg.2
$region0: #{neg.2}
  #allocation0 [shape = 's32[1]{0}', space=sflag, size = 0x4, scoped, tag = 'scoped memory for neg.2']
  %s0 = inlined_call_operand.vmem [shape: f32[8,128], index: 0, kind: input, shape index: {}]
  %s1 = inlined_call_operand.vmem [shape: f32[8,128], index: 1, kind: output, shape index: {}]
  %v2 = vld [vmem:[%s0] sm:$0xff]
  %3 = xla_tuple %v2
  %4 = xla_tuple %3
  %v5 = vxor.u32 %v2, 2147483648
  %6 = xla_tuple %v5
  %7 = vst [vmem:[%s1] sm:$0xff] %v5

// kernel: conformal_forward.1
$region0: #{conformal_forward.1}
  #allocation0 [shape = 'u32[]', space=smem, size = 0x4, offset = 0x4, fixed_abs, tag = 'smem constant byte address 0x4 - core index']
  #allocation1 [shape = 'u32[144,128]{1,0:T(1,128)}', space=vmem, size = 0x12000, scoped, tag = 'internal scratch']
  %s0 = inlined_call_operand.vmem [shape: f32[8,128], index: 0, kind: input, shape index: {}]
  %s1 = inlined_call_operand.vmem [shape: f32[1,128], index: 1, kind: input, shape index: {}]
  %s2 = inlined_call_operand.vmem [shape: f32[8,1], index: 2, kind: input, shape index: {}]
  %s3 = inlined_call_operand.vmem [shape: f32[128,128], index: 3, kind: input, shape index: {}]
  %s4 = inlined_call_operand.vmem [shape: s32[8,1], index: 4, kind: output, shape index: {}]
  %s5 = sld [smem:[#allocation0]]
  $region26: #{conformal_forward.1} parent=0
    _
  %s7 = ssub.s32 1, %s5
  %s8 = scalar_select 0, %s7, %s5
  // Predicated region
  $region2: #{conformal_forward.1} parent=0 // pred_check
    _
  $region3: #{conformal_forward.1} parent=0 // pred_check_branch
    %10 = sbr.rel (0) target = $region5
  $region4: #{conformal_forward.1} parent=0 // pred_region
    _
  $region5: #{conformal_forward.1} parent=0 // pred_fallthru
    _
  // Predicated region
  $region6: #{conformal_forward.1} parent=0 // pred_check
    _
  $region7: #{conformal_forward.1} parent=0 // pred_check_branch
    %12 = sbr.rel (0) target = $region9
  $region8: #{conformal_forward.1} parent=0 // pred_region
    _
  $region9: #{conformal_forward.1} parent=0 // pred_fallthru
    _
  // Predicated region
  $region10: #{conformal_forward.1} parent=0 // pred_check
    _
  $region11: #{conformal_forward.1} parent=0 // pred_check_branch
    %14 = sbr.rel (0) target = $region13
  $region12: #{conformal_forward.1} parent=0 // pred_region
    _
  $region13: #{conformal_forward.1} parent=0 // pred_fallthru
    _
  // Predicated region
  $region14: #{conformal_forward.1} parent=0 // pred_check
    _
  $region15: #{conformal_forward.1} parent=0 // pred_check_branch
    %16 = sbr.rel (0) target = $region17
  $region16: #{conformal_forward.1} parent=0 // pred_region
    _
  $region17: #{conformal_forward.1} parent=0 // pred_fallthru
    _
  %v17 = vld [vmem:[%s0] sm:$0xff]
  %v18 = vmul.f32 %v17, 0.7692308
  %20 = vset.pattern.permute.xlu0 0
  %21 = vperm.xlu0 %20, %v18
  %v22 = vpop.permute.xlu0 %21
  %v24 = vsub.f32 %v18, %v22
  %v25 = vmul.f32 %v24, 1.442695
  %v26 = vpow.pop %v25
  %27 = vadd.xlane.f32.xlu0 %v26
  %v28 = vpop.xlane.xlu0 %27
  %v29 = vrcp.pop %v28
  %v30 = vmul.f32 %v26, %v29
  %v31 = vld [vmem:[%s1] sm:$0x1]
  %v33 = vlaneseq
  %v34 = vshrl.u32 %v33, 7
  %v35 = vsub.s32 0, %v34
  %v36 = vrot.slane %v31, %v35
  %v38 = vadd.f32 %v30, %v36
  %v39 = vld [vmem:[%s3] sm:$0xff]
  %v40 = vld [vmem:[%s3 + $0x8] sm:$0xff]
  %v41 = vld [vmem:[%s3 + $0x10] sm:$0xff]
  %v42 = vld [vmem:[%s3 + $0x18] sm:$0xff]
  %v43 = vld [vmem:[%s3 + $0x20] sm:$0xff]
  %v44 = vld [vmem:[%s3 + $0x28] sm:$0xff]
  %v45 = vld [vmem:[%s3 + $0x30] sm:$0xff]
  %v46 = vld [vmem:[%s3 + $0x38] sm:$0xff]
  %v47 = vld [vmem:[%s3 + $0x40] sm:$0xff]
  %v48 = vld [vmem:[%s3 + $0x48] sm:$0xff]
  %v49 = vld [vmem:[%s3 + $0x50] sm:$0xff]
  %v50 = vld [vmem:[%s3 + $0x58] sm:$0xff]
  %v51 = vld [vmem:[%s3 + $0x60] sm:$0xff]
  %v52 = vld [vmem:[%s3 + $0x68] sm:$0xff]
  %v53 = vld [vmem:[%s3 + $0x70] sm:$0xff]
  %v54 = vld [vmem:[%s3 + $0x78] sm:$0xff]
  %55 = vmatprep.subr.mxu0 0.0
  %56 = vmatpush1.msra.mxu0 %v39
  %57 = vmatprep.subr.mxu0 0.0
  %58 = vmatpush1.msra.mxu0 %v40
  %59 = vmatprep.subr.mxu0 0.0
  %60 = vmatpush1.msra.mxu0 %v41
  %61 = vmatprep.subr.mxu0 0.0
  %62 = vmatpush1.msra.mxu0 %v42
  %63 = vmatprep.subr.mxu0 0.0
  %64 = vmatpush1.msra.mxu0 %v43
  %65 = vmatprep.subr.mxu0 0.0
  %66 = vmatpush1.msra.mxu0 %v44
  %67 = vmatprep.subr.mxu0 0.0
  %68 = vmatpush1.msra.mxu0 %v45
  %69 = vmatprep.subr.mxu0 0.0
  %70 = vmatpush1.msra.mxu0 %v46
  %71 = vmatprep.subr.mxu0 0.0
  %72 = vmatpush1.msra.mxu0 %v47
  %73 = vmatprep.subr.mxu0 0.0
  %74 = vmatpush1.msra.mxu0 %v48
  %75 = vmatprep.subr.mxu0 0.0
  %76 = vmatpush1.msra.mxu0 %v49
  %77 = vmatprep.subr.mxu0 0.0
  %78 = vmatpush1.msra.mxu0 %v50
  %79 = vmatprep.subr.mxu0 0.0
  %80 = vmatpush1.msra.mxu0 %v51
  %81 = vmatprep.subr.mxu0 0.0
  %82 = vmatpush1.msra.mxu0 %v52
  %83 = vmatprep.subr.mxu0 0.0
  %84 = vmatpush1.msra.mxu0 %v53
  %85 = vmatprep.subr.mxu0 0.0
  %86 = vmatpush1.msra.mxu0 %v54
  %87 = vmatprep.subr.mxu0 0.0
  %88 = vmatpush1.msra.mxu0 0.0
  %89 = vmatprep.subr.mxu0 0.0
  %90 = vmatpush1.msra.mxu0 0.0
  %91 = vmatprep.subr.mxu0 0.0
  %92 = vmatpush1.msra.mxu0 0.0
  %93 = vmatprep.subr.mxu0 0.0
  %94 = vmatpush1.msra.mxu0 0.0
  %95 = vmatprep.subr.mxu0 0.0
  %96 = vmatpush1.msra.mxu0 0.0
  %97 = vmatprep.subr.mxu0 0.0
  %98 = vmatpush1.msra.mxu0 0.0
  %99 = vmatprep.subr.mxu0 0.0
  %100 = vmatpush1.msra.mxu0 0.0
  %101 = vmatprep.subr.mxu0 0.0
  %102 = vmatpush1.msra.mxu0 0.0
  %103 = vmatprep.subr.mxu0 0.0
  %104 = vmatpush1.msra.mxu0 0.0
  %105 = vmatprep.subr.mxu0 0.0
  %106 = vmatpush1.msra.mxu0 0.0
  %107 = vmatprep.subr.mxu0 0.0
  %108 = vmatpush1.msra.mxu0 0.0
  %109 = vmatprep.subr.mxu0 0.0
  %110 = vmatpush1.msra.mxu0 0.0
  %111 = vmatprep.subr.mxu0 0.0
  %112 = vmatpush1.msra.mxu0 0.0
  %113 = vmatprep.subr.mxu0 0.0
  %114 = vmatpush1.msra.mxu0 0.0
  %115 = vmatprep.subr.mxu0 0.0
  %116 = vmatpush1.msra.mxu0 0.0
  %117 = vmatprep.subr.mxu0 0.0
  %118 = vmatpush1.msra.mxu0 0.0
  %119 = vmatprep.mubr.f32.mxu0 0.0
  %120 = vmatmul.mubr.f32.gmra.mrb[0].mxu0 %v38
  %v121 = vpop.f32.mrb[0].mxu0
  %v122 = vadd.f32 0.0, %v121
  %v123 = vpop.f32.mrb[0].mxu0
  %124 = vdwg.mxu0
  %vm125 = vcmp.le.f32.partialorder %v122, 0.93
  %v126 = vsel %vm125, 1, 0
  %v127 = vand.u32 %v126, 65535
  %v128 = vshrl.u32 %v126, 16
  %v129 = vcvt.s32.f32 %v127
  %v130 = vcvt.s32.f32 %v128
  %131 = vadd.xlane.f32.xlu0 %v129
  %v132 = vpop.xlane.xlu0 %131
  %133 = vadd.xlane.f32.xlu0 %v130
  %v134 = vpop.xlane.xlu0 %133
  %v135 = vcvt.f32.s32 %v132
  %v136 = vcvt.f32.s32 %v134
  %v137 = vshll.u32 %v136, 16
  %v138 = vadd.s32 %v137, %v135
  %v139 = vadd.s32 %v138, 1
  %vm140 = vcmp.lt.s32.totalorder %v139, 128
  %v141 = vsel %vm140, %v139, 128
  %v142 = vlaneseq
  %v143 = vand.u32 %v142, 127
  %v144 = vsub.s32 %v141, 1
  %vm145 = vcmp.eq.s32.totalorder %v143, %v144
  %v146 = vsel %vm145, 1, 0
  %v147 = vcvt.s32.f32 %v146
  %v148 = vmul.f32 %v30, %v147
  %149 = vadd.xlane.f32.xlu0 %v148
  %v150 = vpop.xlane.xlu0 %149
  %v151 = vmul.f32 %v122, %v147
  %152 = vadd.xlane.f32.xlu0 %v151
  %v153 = vpop.xlane.xlu0 %152
  %v154 = vsub.f32 0.93, %v153
  %v155 = vadd.f32 %v154, %v150
  %v156 = vmax.f32 %v150, 1e-30
  %v157 = vrcp.pop %v156
  %v158 = vmul.f32 %v155, %v157
  %v159 = vld [vmem:[%s2] sm:$0xff]
  %vm160 = vcmp.ge.f32.partialorder %v159, %v158
  %v161 = vsel %vm160, 1, 0
  %v162 = vsub.s32 %v141, %v161
  %vm163 = vcmp.eq.s32.totalorder %v162, 0
  %v164 = vsel %vm163, 1, %v162
  %vm165 = vcmask 7168
  %166 = vst.msk [vmem:[%s4] sm:$0xff] %vm165, %v164
  // Predicated region
  $region18: #{conformal_forward.1} parent=0 // pred_check
    _
  $region19: #{conformal_forward.1} parent=0 // pred_check_branch
    %168 = sbr.rel (0) target = $region21
  $region20: #{conformal_forward.1} parent=0 // pred_region
    _
  $region21: #{conformal_forward.1} parent=0 // pred_fallthru
    _
  // Predicated region
  $region22: #{conformal_forward.1} parent=0 // pred_check
    _
  $region23: #{conformal_forward.1} parent=0 // pred_check_branch
    %170 = sbr.rel (0) target = $region25
  $region24: #{conformal_forward.1} parent=0 // pred_region
    _
  $region25: #{conformal_forward.1} parent=0 // pred_fallthru
    _

</llo_original>
